<compile_context>
chip_gen: v7x
topology: tpu7x:2x2x1
jax: 0.10.0
libtpu: 0.0.40
codegen_flags: <defaults>
</compile_context>

<pallas_src>
import functools

import jax
import jax.numpy as jnp
from jax import lax
from jax.experimental import pallas as pl
from jax.experimental.pallas import tpu as pltpu

EPS = 1e-8
LANES = 128
SUBLANES = 8
SMALL_ROWS = 512      # single-block path below this many rows
CHUNK_ROWS = 256      # inner accumulation chunk for large tiles


def _round_up(n, m):
    return ((n + m - 1) // m) * m


def _num_tensorcores():
    """Best-effort TensorCores-per-chip (v7x: 2, v5e/v6e: 1). Safe default 1."""
    try:
        info = pltpu.get_tpu_info()
        for attr in ("num_cores", "core_count", "tensorcores_per_chip",
                     "num_tensorcores"):
            v = getattr(info, attr, None)
            if v:
                return int(v)
    except Exception:
        pass
    try:
        v = getattr(jax.devices()[0], "num_cores", None)
        if v:
            return int(v)
    except Exception:
        pass
    return 1


def _disc_loss_kernel(x_ref, t_ref, out_ref, *, rows_valid, steps, chunk,
                      t_is_row, mask):
    """Grid = (num_partials [parallel], steps [arbitrary, reduction]).

    Accumulates sum(-log(|x - t| + EPS)) of this block's valid rows directly
    into this partial's (8, 128) output block.
    """
    p = pl.program_id(0)
    j = pl.program_id(1)

    @pl.when(j == 0)
    def _():
        out_ref[...] = jnp.zeros_like(out_ref)

    tm = x_ref.shape[0]
    # Unclamped global first row of this block: rows past `rows_valid`
    # (partial last block, or a clamped duplicate block) are masked to zero.
    block_row0 = (p * steps + j) * tm

    if t_is_row:
        t_row = t_ref[...].astype(jnp.float32)          # (1, 128), hoisted

    def body(c, acc):
        r0 = pl.multiple_of(c * chunk, chunk)
        x = x_ref[pl.ds(r0, chunk), :].astype(jnp.float32)
        if t_is_row:
            t = t_row                                    # sublane broadcast
        else:
            t = t_ref[pl.ds(r0, chunk), :].astype(jnp.float32)
        val = -jnp.log(jnp.abs(x - t) + jnp.float32(EPS))
        if mask:
            rid = block_row0 + r0 + lax.broadcasted_iota(
                jnp.int32, (chunk, 1), 0)
            val = jnp.where(rid < rows_valid, val, jnp.float32(0.0))
        # (chunk,128) -> (chunk//8, 8, 128): layout no-op; the leading-axis
        # sum is pure VPU adds (no per-step cross-lane reduce).
        return acc + val.reshape(chunk // SUBLANES, SUBLANES, LANES).sum(axis=0)

    acc = lax.fori_loop(0, tm // chunk, body,
                        jnp.zeros((SUBLANES, LANES), jnp.float32),
                        unroll=True)
    out_ref[...] += acc


def discriminator_loss(x, t):
    """mean(-log(|x - t| + 1e-8)) computed with a Pallas TPU kernel."""
    x = jnp.asarray(x)
    t = jnp.asarray(t)
    total = x.size
    assert total > 0

    xf = x.reshape(-1)
    scalar_t = (t.size == 1)
    if scalar_t:
        t_val32 = t.reshape(()).astype(jnp.float32)
    else:
        tf = jnp.broadcast_to(t, x.shape).reshape(-1)

    rows = total // LANES           # whole lane-rows -> kernel
    rem = total - rows * LANES      # <128-element tail -> jnp epilogue

    partial_sums = []

    if rows > 0:
        # Free reshape when total is lane-aligned (common case).
        # TODO(synk): when total % 128 != 0 the prefix slice below may
        # materialize one copy of the bulk; the <128-element remainder itself
        # is handled by the jnp epilogue further down.
        x2 = (xf if rem == 0 else xf[: rows * LANES]).reshape(rows, LANES)
        if scalar_t:
            t2 = jnp.broadcast_to(t_val32, (1, LANES))   # 512 B, not streamed
        else:
            t2 = (tf if rem == 0 else tf[: rows * LANES]).reshape(rows, LANES)

        x_item = jnp.dtype(x2.dtype).itemsize
        # dtype-aware sublane alignment (f32 -> 8 rows, bf16 -> 16, int8 -> 32)
        row_align = max(SUBLANES, 32 // x_item)
        if not scalar_t:
            row_align = max(row_align,
                            max(SUBLANES, 32 // jnp.dtype(t2.dtype).itemsize))

        # Keep HBM bytes per grid step roughly constant across dtypes.
        tm_max = 2048 if x_item >= 4 else 4096

        if rows <= SMALL_ROWS:
            tm = _round_up(rows, row_align)
            chunk = tm
        else:
            tm = tm_max
            chunk = CHUNK_ROWS

        total_blocks = pl.cdiv(rows, tm)
        num_partials = 1
        if total_blocks >= 2:
            num_partials = max(1, min(_num_tensorcores(), 2, total_blocks))
        steps = pl.cdiv(total_blocks, num_partials)
        last_block = total_blocks - 1
        covered_rows = num_partials * steps * tm
        mask_needed = covered_rows > rows

        def x_map(p, j):
            # Clamp so a fully out-of-range block (uneven split across
            # partials) re-reads an in-bounds block; its contribution is
            # masked to zero inside the kernel.
            return (jnp.minimum(p * steps + j, last_block), 0)

        if scalar_t:
            t_spec = pl.BlockSpec((1, LANES), lambda p, j: (0, 0))
        else:
            t_spec = pl.BlockSpec((tm, LANES), x_map)

        n_elems = covered_rows * LANES
        in_bytes = rows * LANES * x_item
        if not scalar_t:
            in_bytes += rows * LANES * jnp.dtype(t2.dtype).itemsize
        cost = pl.CostEstimate(
            flops=4 * n_elems,
            transcendentals=n_elems,
            bytes_accessed=in_bytes + num_partials * SUBLANES * LANES * 4,
        )

        kernel = functools.partial(
            _disc_loss_kernel,
            rows_valid=rows, steps=steps, chunk=chunk,
            t_is_row=scalar_t, mask=mask_needed)

        partials = pl.pallas_call(
            kernel,
            out_shape=jax.ShapeDtypeStruct(
                (num_partials * SUBLANES, LANES), jnp.float32),
            grid_spec=pltpu.PrefetchScalarGridSpec(
                num_scalar_prefetch=0,
                grid=(num_partials, steps),
                in_specs=[pl.BlockSpec((tm, LANES), x_map), t_spec],
                out_specs=pl.BlockSpec((SUBLANES, LANES), lambda p, j: (p, 0)),
            ),
            compiler_params=pltpu.CompilerParams(
                dimension_semantics=("parallel", "arbitrary"),
                vmem_limit_bytes=32 * 1024 * 1024,
            ),
            cost_estimate=cost,
        )(x2, t2)
        partial_sums.append(jnp.sum(partials))

    if rem:
        # <128-element lane remainder: negligible, done in plain jnp.
        x_tail = xf[rows * LANES:].astype(jnp.float32)
        t_tail = t_val32 if scalar_t else tf[rows * LANES:].astype(jnp.float32)
        partial_sums.append(
            jnp.sum(-jnp.log(jnp.abs(x_tail - t_tail) + jnp.float32(EPS))))

    total_sum = partial_sums[0]
    for s in partial_sums[1:]:
        total_sum = total_sum + s
    return total_sum / jnp.float32(total)


def discriminator_loss_ref(x, t):
    x32 = jnp.asarray(x, jnp.float32)
    t32 = jnp.broadcast_to(jnp.asarray(t, jnp.float32), x32.shape)
    return jnp.mean(-jnp.log(jnp.abs(x32 - t32) + EPS))


def _check(x, t, rtol=1e-4, atol=1e-5):
    out = jax.block_until_ready(discriminator_loss(x, t))
    ref = discriminator_loss_ref(x, t)
    assert jnp.allclose(out, ref, rtol=rtol, atol=atol), (out, ref)


if __name__ == "__main__":
    key = jax.random.PRNGKey(0)
    k1, k2, k3 = jax.random.split(key, 3)

    # 1) Spec-sized test: NCHW discriminator logits vs. real/fake label map.
    x = jax.random.uniform(k1, (2, 4, 16, 16), dtype=jnp.float32)
    t = jnp.zeros((2, 4, 16, 16), dtype=jnp.float32)
    t = t.at[1].set(1.0)
    _check(x, t)

    # 2) Scalar label -> t is NOT streamed (tiny (1,128) VMEM row path).
    _check(x, jnp.float32(1.0))

    # 3) Odd size (not a multiple of 128) -> ragged-row mask + jnp tail.
    x_odd = jax.random.uniform(k2, (3, 5, 7, 11), dtype=jnp.float32)
    _check(x_odd, jnp.zeros_like(x_odd))
    _check(x_odd, jnp.float32(0.0))

    # 4) bf16 inputs -> bf16 DMA, f32 compute inside the kernel.
    _check(x.astype(jnp.bfloat16), t.astype(jnp.bfloat16))

    # 5) Larger input -> multi-step carried output accumulator, masked tail
    #    block, chunked (256,128) inner accumulation loop.
    x_big = jax.random.uniform(k3, (2, 8, 144, 144), dtype=jnp.float32)
    t_big = jnp.zeros_like(x_big).at[1].set(1.0)
    _check(x_big, t_big)
    _check(x_big, jnp.float32(1.0))

    print("KERNEL_OK")
</pallas_src>

<mosaic_0001>
module attributes {stable_mosaic.version = 11 : i64} {
  func.func @_disc_loss_kernel(%arg0: i32, %arg1: i32, %arg2: memref<16x128xf32, #tpu.memory_space<vmem>>, %arg3: memref<16x128xf32, #tpu.memory_space<vmem>>, %arg4: memref<8x128xf32, #tpu.memory_space<vmem>>) attributes {dimension_semantics = [#tpu.dimension_semantics<parallel>, #tpu.dimension_semantics<arbitrary>], iteration_bounds = array<i64: 1, 1>, scalar_prefetch = 0 : i64, scratch_operands = 0 : i64, tpu.core_type = #tpu.core_type<tc>, window_params = [{transform_indices = @transform_0, window_bounds = array<i64: 16, 128>}, {transform_indices = @transform_1, window_bounds = array<i64: 16, 128>}, {transform_indices = @transform_2, window_bounds = array<i64: 8, 128>}]} {
    %c0_i32 = arith.constant 0 : i32
    %0 = arith.cmpi eq, %arg1, %c0_i32 : i32
    %1 = arith.extui %0 : i1 to i32
    %c0_i32_0 = arith.constant 0 : i32
    %2 = arith.cmpi ne, %1, %c0_i32_0 : i32
    scf.if %2 {
      %cst_10 = arith.constant 0.000000e+00 : f32
      %23 = vector.broadcast %cst_10 : f32 to vector<8x128xf32>
      %c0_11 = arith.constant 0 : index
      %c0_12 = arith.constant 0 : index
      %24 = vector.load %arg4[%c0_11, %c0_12] : memref<8x128xf32, #tpu.memory_space<vmem>>, vector<8x128xf32>
      tpu.vector_store %arg4[%c0_11, %c0_12], %23 {strides = array<i32>} : memref<8x128xf32, #tpu.memory_space<vmem>>, vector<8x128xf32>,
    } else {
    }
    %cst = arith.constant 0.000000e+00 : f32
    %3 = vector.broadcast %cst : f32 to vector<8x128xf32>
    %c0_i32_1 = arith.constant 0 : i32
    %c16_i32 = arith.constant 16 : i32
    %4 = arith.muli %c0_i32_1, %c16_i32 : i32
    %5 = tpu.assume_multiple %4, 16 : i32
    %6 = arith.index_cast %5 : i32 to index
    %c0 = arith.constant 0 : index
    %7 = vector.load %arg2[%6, %c0] : memref<16x128xf32, #tpu.memory_space<vmem>>, vector<16x128xf32>
    %8 = arith.index_cast %5 : i32 to index
    %c0_2 = arith.constant 0 : index
    %9 = vector.load %arg3[%8, %c0_2] : memref<16x128xf32, #tpu.memory_space<vmem>>, vector<16x128xf32>
    %10 = arith.subf %7, %9 : vector<16x128xf32>
    %11 = math.absf %10 : vector<16x128xf32>
    %cst_3 = arith.constant 9.99999993E-9 : f32
    %12 = vector.broadcast %cst_3 : f32 to vector<16x128xf32>
    %13 = arith.addf %11, %12 : vector<16x128xf32>
    %14 = math.log %13 : vector<16x128xf32>
    %cst_4 = arith.constant 0.000000e+00 : f32
    %15 = vector.broadcast %cst_4 : f32 to vector<16x128xf32>
    %16 = arith.subf %15, %14 : vector<16x128xf32>
    %17 = vector.shape_cast %16 : vector<16x128xf32> to vector<2x8x128xf32>
    %cst_5 = arith.constant dense<0.000000e+00> : vector<8x128xf32>
    %18 = vector.multi_reduction <add>, %17, %cst_5 [0] : vector<2x8x128xf32> to vector<8x128xf32>
    %19 = arith.addf %3, %18 : vector<8x128xf32>
    %c1_i32 = arith.constant 1 : i32
    %c0_6 = arith.constant 0 : index
    %c0_7 = arith.constant 0 : index
    %20 = vector.load %arg4[%c0_6, %c0_7] : memref<8x128xf32, #tpu.memory_space<vmem>>, vector<8x128xf32>
    %21 = arith.addf %20, %19 : vector<8x128xf32>
    %c0_8 = arith.constant 0 : index
    %c0_9 = arith.constant 0 : index
    %22 = vector.load %arg4[%c0_8, %c0_9] : memref<8x128xf32, #tpu.memory_space<vmem>>, vector<8x128xf32>
    tpu.vector_store %arg4[%c0_8, %c0_9], %21 {strides = array<i32>} : memref<8x128xf32, #tpu.memory_space<vmem>>, vector<8x128xf32>,
    return
  }
  func.func @transform_0(%arg0: i32, %arg1: i32) -> (i32, i32) {
    %c1_i32 = arith.constant 1 : i32
    %0 = arith.muli %arg0, %c1_i32 : i32
    %1 = arith.addi %0, %arg1 : i32
    %c0_i32 = arith.constant 0 : i32
    %2 = arith.minsi %1, %c0_i32 : i32
    %c0_i32_0 = arith.constant 0 : i32
    %c0_i32_1 = arith.constant 0 : i32
    return %2, %c0_i32_0 : i32, i32
  }
  func.func @transform_1(%arg0: i32, %arg1: i32) -> (i32, i32) {
    %c1_i32 = arith.constant 1 : i32
    %0 = arith.muli %arg0, %c1_i32 : i32
    %1 = arith.addi %0, %arg1 : i32
    %c0_i32 = arith.constant 0 : i32
    %2 = arith.minsi %1, %c0_i32 : i32
    %c0_i32_0 = arith.constant 0 : i32
    %c0_i32_1 = arith.constant 0 : i32
    return %2, %c0_i32_0 : i32, i32
  }
  func.func @transform_2(%arg0: i32, %arg1: i32) -> (i32, i32) {
    %c0_i32 = arith.constant 0 : i32
    %c0_i32_0 = arith.constant 0 : i32
    return %arg0, %c0_i32 : i32, i32
  }
}

</mosaic_0001>

<llo_original>
// kernel: tpu_custom_call.1
$region0: #{tpu_custom_call.1}
  #allocation0 [shape = 'u32[]', space=smem, size = 0x4, offset = 0x4, fixed_abs, tag = 'smem constant byte address 0x4 - core index']
  #allocation1 [shape = 'u32[144,128]{1,0:T(1,128)}', space=vmem, size = 0x12000, scoped, tag = 'internal scratch']
  %s0 = inlined_call_operand.hbm [shape: f32[16,128], index: 0, kind: input, shape index: {}]
  %s1 = inlined_call_operand.hbm [shape: f32[16,128], index: 1, kind: input, shape index: {}]
  %s2 = inlined_call_operand.hbm [shape: f32[8,128], index: 2, kind: output, shape index: {}]
  %s3 = sld [smem:[#allocation0]]
  $region30: #{tpu_custom_call.1} parent=0
    _
  %s5 = ssub.s32 1, %s3
  %s6 = scalar_select 0, %s5, %s3
  $region1: #{tpu_custom_call.1} parent=0
    #allocation2 [shape = 'u8[8192]{0}', space=vmem, size = 0x2000, scoped, tag = 'input window, operand 0, single buffered']
    #allocation3 [shape = 's32[1]{0}', space=sflag, size = 0x4, scoped, tag = 'scoped memory for tpu_custom_call.1']
    #allocation4 [shape = 's32[1]{0}', space=sflag, size = 0x4, scoped, tag = 'scoped memory for tpu_custom_call.1']
    #allocation5 [shape = 'u8[8192]{0}', space=vmem, size = 0x2000, scoped, tag = 'input window, operand 1, single buffered']
    #allocation6 [shape = 's32[1]{0}', space=sflag, size = 0x4, scoped, tag = 'scoped memory for tpu_custom_call.1']
    #allocation7 [shape = 'u8[4096]{0}', space=vmem, size = 0x1000, scoped, tag = 'output window, operand 0, single buffered']
    %7 = vsyncpa [#allocation3], 0
    %8 = vsyncpa [#allocation6], 0
    %9 = vsyncpa [#allocation4], 0
    // Predicated region
    $region2: #{tpu_custom_call.1} parent=1 // pred_check
      _
    $region3: #{tpu_custom_call.1} parent=1 // pred_check_branch
      %11 = sbr.rel (0) target = $region5
    $region4: #{tpu_custom_call.1} parent=1 // pred_region
      %s12 = sadd.s32 0, 0
      %p13 = scmp.lt.s32.totalorder %s12, 0
      %s14 = scalar_select %p13, %s12, 0
      %s15 = smul.u32 2, %s14
      %s17 = ssub.s32 256, 256
      %18 = vsyncadd [#allocation3], %s17
      %s19 = smul.addr %s15, 128
      %s20 = scalar_lea.hbm %s0, %s19
      %s21 = sshll.u32 [#allocation2], 4
      %s22 = int_to_ptr.vmem [resolvable:$true] %s21
      %27 = dma.hbm_to_vmem [thread:$0]  %s20, 256, %s22, [#allocation3], 128, 128, 8
    $region5: #{tpu_custom_call.1} parent=1 // pred_fallthru
      _
    // Predicated region
    $region6: #{tpu_custom_call.1} parent=1 // pred_check
      _
    $region7: #{tpu_custom_call.1} parent=1 // pred_check_branch
      %29 = sbr.rel (0) target = $region9
    $region8: #{tpu_custom_call.1} parent=1 // pred_region
      %s30 = sadd.s32 0, 0
      %p31 = scmp.lt.s32.totalorder %s30, 0
      %s32 = scalar_select %p31, %s30, 0
      %s33 = smul.u32 2, %s32
      %s35 = ssub.s32 256, 256
      %36 = vsyncadd [#allocation6], %s35
      %s37 = smul.addr %s33, 128
      %s38 = scalar_lea.hbm %s1, %s37
      %s39 = sshll.u32 [#allocation5], 4
      %s40 = int_to_ptr.vmem [resolvable:$true] %s39
      %45 = dma.hbm_to_vmem [thread:$0]  %s38, 256, %s40, [#allocation6], 128, 128, 8
    $region9: #{tpu_custom_call.1} parent=1 // pred_fallthru
      _
    // Predicated region
    $region10: #{tpu_custom_call.1} parent=1 // pred_check
      _
    $region11: #{tpu_custom_call.1} parent=1 // pred_check_branch
      %47 = sbr.rel (0) target = $region13
    $region12: #{tpu_custom_call.1} parent=1 // pred_region
      %48 = dma.done [#allocation3], 256
    $region13: #{tpu_custom_call.1} parent=1 // pred_fallthru
      _
    // Predicated region
    $region14: #{tpu_custom_call.1} parent=1 // pred_check
      _
    $region15: #{tpu_custom_call.1} parent=1 // pred_check_branch
      %50 = sbr.rel (0) target = $region17
    $region16: #{tpu_custom_call.1} parent=1 // pred_region
      %51 = dma.done [#allocation6], 256
    $region17: #{tpu_custom_call.1} parent=1 // pred_fallthru
      _
    %s52 = sadd.s32 0, 0
    %p53 = scmp.lt.s32.totalorder %s52, 0
    %s54 = scalar_select %p53, %s52, 0
    %s55 = smul.u32 2, %s54
    %s56 = sadd.s32 0, 0
    %p57 = scmp.lt.s32.totalorder %s56, 0
    %s58 = scalar_select %p57, %s56, 0
    %s59 = smul.u32 2, %s58
    %p60 = scmp.eq.s32.totalorder 0, 0
    // Predicated region
    $region18: #{tpu_custom_call.1} parent=1 // pred_check
      %p61 = pneg %p60
    $region19: #{tpu_custom_call.1} parent=1 // pred_check_branch
      %63 = sbr.rel (%p61) target = $region21
    $region20: #{tpu_custom_call.1} parent=1 // pred_region
      %64 = vst [vmem:[#allocation7] sm:$0xff] 0.0
    $region21: #{tpu_custom_call.1} parent=1 // pred_fallthru
      _
    %v65 = vld [vmem:[#allocation2] sm:$0xff]
    %v66 = vld [vmem:[#allocation2 + $0x8] sm:$0xff]
    %v67 = vld [vmem:[#allocation5] sm:$0xff]
    %v68 = vld [vmem:[#allocation5 + $0x8] sm:$0xff]
    %v69 = vsub.f32 %v65, %v67
    %v70 = vsub.f32 %v66, %v68
    %v71 = vand.u32 2147483647, %v69
    %v72 = vand.u32 2147483647, %v70
    %v73 = vadd.f32 %v71, 1e-08
    %v74 = vadd.f32 %v72, 1e-08
    %v75 = vlog2.pop %v73
    %v76 = vmul.f32 %v75, 0.6931472
    %v77 = vlog2.pop %v74
    %v78 = vmul.f32 %v77, 0.6931472
    %v79 = vsub.f32 0.0, %v76
    %v80 = vsub.f32 0.0, %v78
    %v81 = vadd.f32 %v79, %v80
    %v82 = vadd.f32 %v81, 0.0
    %v83 = vld [vmem:[#allocation7] sm:$0xff]
    %v84 = vadd.f32 %v83, %v82
    %85 = vst [vmem:[#allocation7] sm:$0xff] %v84
    // Predicated region
    $region22: #{tpu_custom_call.1} parent=1 // pred_check
      _
    $region23: #{tpu_custom_call.1} parent=1 // pred_check_branch
      %87 = sbr.rel (0) target = $region25
    $region24: #{tpu_custom_call.1} parent=1 // pred_region
      %s89 = ssub.s32 128, 128
      %90 = vsyncadd [#allocation4], %s89
      %s92 = sshll.u32 [#allocation7], 4
      %s93 = int_to_ptr.vmem [resolvable:$true] %s92
      %95 = dma.vmem_to_hbm [thread:$0]  %s93, 128, %s2, [#allocation4]
    $region25: #{tpu_custom_call.1} parent=1 // pred_fallthru
      _
    // Predicated region
    $region26: #{tpu_custom_call.1} parent=1 // pred_check
      _
    $region27: #{tpu_custom_call.1} parent=1 // pred_check_branch
      %97 = sbr.rel (0) target = $region29
    $region28: #{tpu_custom_call.1} parent=1 // pred_region
      %98 = dma.done [#allocation4], 128
    $region29: #{tpu_custom_call.1} parent=1 // pred_fallthru
      _
    %99 = vsyncpa [#allocation3], 1
    %100 = vsyncpa [#allocation6], 1
    %101 = vsyncpa [#allocation4], 1

</llo_original>
